<compile_context>
chip_gen: v7x
topology: tpu7x:2x2x1
jax: 0.10.0
libtpu: 0.0.40
codegen_flags: <defaults>
</compile_context>

<pallas_src>
import functools

import jax
import jax.numpy as jnp
from jax.experimental import pallas as pl
from jax.experimental.pallas import tpu as pltpu

LANE = 128
TB_MAX = 2048  # largest batch tile; keeps per-tile activations << 32 MiB scoped VMEM


def _round_up(x, m):
    return (x + m - 1) // m * m


def _actor_kernel(max_action):
    def kernel(x_ref, w1_ref, b1_ref, w2_ref, b2_ref, w3_ref, b3_ref, o_ref):
        # f32 -> bf16 cast of the input tile happens here (in-register, hidden
        # under the MXU) instead of in a separate wrapper-side XLA pass.
        xb = x_ref[...].astype(jnp.bfloat16)
        # layer 1: Linear(state, 400) + ReLU   (bf16 operands, f32 accumulate)
        h1 = jnp.dot(xb, w1_ref[...], preferred_element_type=jnp.float32)
        h1 = jnp.maximum(h1 + b1_ref[...], 0.0)          # f32 VPU work
        # layer 2: Linear(400, 300) + ReLU
        h2 = jnp.dot(h1.astype(jnp.bfloat16), w2_ref[...],
                     preferred_element_type=jnp.float32)
        h2 = jnp.maximum(h2 + b2_ref[...], 0.0)
        # layer 3: Linear(300, action), then max_action * tanh (f32 EUP)
        h3 = jnp.dot(h2.astype(jnp.bfloat16), w3_ref[...],
                     preferred_element_type=jnp.float32)
        h3 = h3 + b3_ref[...]
        o_ref[...] = (max_action * jnp.tanh(h3)).astype(o_ref.dtype)
    return kernel


def init_actor_params(key, state_dim, action_dim):
    """Mirror nn.Linear init U(-1/sqrt(fan_in), 1/sqrt(fan_in)).

    Weights are stored (in_features, out_features) = transpose of PyTorch.
    Kept in f32; `pad_and_cast_params` produces the padded bf16 copies fed to
    the kernel.
    """
    def linear(k, fan_in, fan_out):
        kw, kb = jax.random.split(k)
        bound = 1.0 / jnp.sqrt(jnp.float32(fan_in))
        w = jax.random.uniform(kw, (fan_in, fan_out), jnp.float32, -bound, bound)
        b = jax.random.uniform(kb, (fan_out,), jnp.float32, -bound, bound)
        return w, b

    k1, k2, k3 = jax.random.split(key, 3)
    w1, b1 = linear(k1, state_dim, 400)
    w2, b2 = linear(k2, 400, 300)
    w3, b3 = linear(k3, 300, action_dim)
    return {"w1": w1, "b1": b1, "w2": w2, "b2": b2, "w3": w3, "b3": b3}


def pad_and_cast_params(params):
    """Zero-pad output dims (and hidden input dims) to multiples of 128.

    Weights -> bf16, biases -> f32 (1, N).  w1 keeps its raw input dim so the
    kernel can consume x without feature-dim padding.  Padding granularity is
    deliberately 128 (not 256): exact on v5e's 128x128 MXUs and free on
    v6e/v7x's 256-wide passes.
    """
    def padw(w, pad_in):
        i, o = w.shape
        ip = _round_up(i, LANE) if pad_in else i
        op = _round_up(o, LANE)
        return jnp.pad(w, ((0, ip - i), (0, op - o))).astype(jnp.bfloat16)

    def padb(b):
        o = b.shape[-1]
        return jnp.pad(b.reshape(1, o),
                       ((0, 0), (0, _round_up(o, LANE) - o))).astype(jnp.float32)

    return {
        "w1": padw(params["w1"], pad_in=False), "b1": padb(params["b1"]),
        "w2": padw(params["w2"], pad_in=True), "b2": padb(params["b2"]),
        "w3": padw(params["w3"], pad_in=True), "b3": padb(params["b3"]),
    }


def _pick_batch_tile(B):
    """Batch-tile heuristic (all sizes static at trace time).

    - multiples of 16 (bf16 packs 16 rows/sublane tile -> unmasked LHS loads)
    - >= 2 grid steps once B >= 64 so v7x's two TensorCores both get work
    - capped at TB_MAX=2048 so activations stay inside the 32 MiB scoped VMEM
      default on v7x while still amortizing the ~0.35us per-step overhead.
    """
    if B <= 16:
        return 16
    if B < 64:
        return _round_up(B, 16)
    n_tiles = max(2, -(-B // TB_MAX))
    return min(_round_up(-(-B // n_tiles), 16), TB_MAX)


@functools.partial(jax.jit, static_argnames=("action_dim", "max_action"))
def actor_forward(x, pparams, action_dim, max_action):
    """x: (B, state_dim) f32. pparams: padded/bf16 params from pad_and_cast_params."""
    w1, b1 = pparams["w1"], pparams["b1"]
    w2, b2 = pparams["w2"], pparams["b2"]
    w3, b3 = pparams["w3"], pparams["b3"]

    B, state_dim = x.shape
    assert w1.shape[0] == state_dim
    H1p = w1.shape[1]
    H2p = w2.shape[1]
    Ap = w3.shape[1]

    TB = _pick_batch_tile(B)
    Bp = _round_up(B, TB)

    # Batch-pad only (f32, raw state_dim lanes); the bf16 cast happens in-kernel.
    x_in = x if Bp == B else jnp.pad(x, ((0, Bp - B), (0, 0)))

    out = pl.pallas_call(
        _actor_kernel(float(max_action)),
        out_shape=jax.ShapeDtypeStruct((Bp, Ap), jnp.float32),
        grid_spec=pltpu.PrefetchScalarGridSpec(
            num_scalar_prefetch=0,
            grid=(Bp // TB,),
            in_specs=[
                pl.BlockSpec((TB, state_dim), lambda i: (i, 0)),   # x tile (f32)
                pl.BlockSpec((state_dim, H1p), lambda i: (0, 0)),  # weights: VMEM-resident
                pl.BlockSpec((1, H1p), lambda i: (0, 0)),
                pl.BlockSpec((H1p, H2p), lambda i: (0, 0)),
                pl.BlockSpec((1, H2p), lambda i: (0, 0)),
                pl.BlockSpec((H2p, Ap), lambda i: (0, 0)),
                pl.BlockSpec((1, Ap), lambda i: (0, 0)),
            ],
            out_specs=pl.BlockSpec((TB, Ap), lambda i: (i, 0)),
        ),
        compiler_params=pltpu.CompilerParams(
            dimension_semantics=("parallel",)),   # shards batch across TCs on v7x
    )(x_in, w1, b1, w2, b2, w3, b3)

    return out[:B, :action_dim]


def actor_reference(x, params, max_action):
    """Pure-JAX f32 reference of the PyTorch forward pass."""
    h = jnp.maximum(x @ params["w1"] + params["b1"], 0.0)
    h = jnp.maximum(h @ params["w2"] + params["b2"], 0.0)
    return max_action * jnp.tanh(h @ params["w3"] + params["b3"])


if __name__ == "__main__":
    # Walker-ish shapes: state_dim=24, action_dim=6, batch=2.
    state_dim, action_dim, max_action = 24, 6, 1.0
    batch = 2

    key = jax.random.PRNGKey(0)
    k_params, k_x = jax.random.split(key)
    params = init_actor_params(k_params, state_dim, action_dim)
    pparams = pad_and_cast_params(params)
    x = jax.random.normal(k_x, (batch, state_dim), jnp.float32)

    out = actor_forward(x, pparams, action_dim, max_action)
    out = jax.block_until_ready(out)

    ref = actor_reference(x, params, max_action)
    assert out.shape == (batch, action_dim)
    # bf16 MXU operands -> ~1e-3 .. 1e-2 abs error vs the f32 reference
    # (not a bit-exact port of the f32 PyTorch Actor; acceptable for inference).
    assert jnp.allclose(out, ref, atol=2e-2, rtol=2e-2), "mismatch vs reference"

    # Exercise a multi-tile batch too (>=2 grid steps path).
    xb = jax.random.normal(jax.random.PRNGKey(1), (300, state_dim), jnp.float32)
    outb = jax.block_until_ready(actor_forward(xb, pparams, action_dim, max_action))
    refb = actor_reference(xb, params, max_action)
    assert outb.shape == (300, action_dim)
    assert jnp.allclose(outb, refb, atol=2e-2, rtol=2e-2), "mismatch vs reference (batched)"

    print("KERNEL_OK")
</pallas_src>

<mosaic_0001>
module attributes {stable_mosaic.version = 11 : i64} {
  func.func @kernel(%arg0: i32, %arg1: memref<16x24xf32, #tpu.memory_space<vmem>>, %arg2: memref<24x512xbf16, #tpu.memory_space<vmem>>, %arg3: memref<1x512xf32, #tpu.memory_space<vmem>>, %arg4: memref<512x384xbf16, #tpu.memory_space<vmem>>, %arg5: memref<1x384xf32, #tpu.memory_space<vmem>>, %arg6: memref<384x128xbf16, #tpu.memory_space<vmem>>, %arg7: memref<1x128xf32, #tpu.memory_space<vmem>>, %arg8: memref<16x128xf32, #tpu.memory_space<vmem>>) attributes {dimension_semantics = [#tpu.dimension_semantics<parallel>], iteration_bounds = array<i64: 1>, scalar_prefetch = 0 : i64, scratch_operands = 0 : i64, tpu.core_type = #tpu.core_type<tc>, window_params = [{transform_indices = @transform_0, window_bounds = array<i64: 16, 24>}, {pipeline_mode = #tpu.pipeline_mode<synchronous>, transform_indices = @transform_1, window_bounds = array<i64: 24, 512>}, {pipeline_mode = #tpu.pipeline_mode<synchronous>, transform_indices = @transform_2, window_bounds = array<i64: 1, 512>}, {pipeline_mode = #tpu.pipeline_mode<synchronous>, transform_indices = @transform_3, window_bounds = array<i64: 512, 384>}, {pipeline_mode = #tpu.pipeline_mode<synchronous>, transform_indices = @transform_4, window_bounds = array<i64: 1, 384>}, {pipeline_mode = #tpu.pipeline_mode<synchronous>, transform_indices = @transform_5, window_bounds = array<i64: 384, 128>}, {pipeline_mode = #tpu.pipeline_mode<synchronous>, transform_indices = @transform_6, window_bounds = array<i64: 1, 128>}, {transform_indices = @transform_7, window_bounds = array<i64: 16, 128>}]} {
    %c0 = arith.constant 0 : index
    %c0_0 = arith.constant 0 : index
    %0 = vector.load %arg1[%c0, %c0_0] : memref<16x24xf32, #tpu.memory_space<vmem>>, vector<16x24xf32>
    %1 = arith.truncf %0 : vector<16x24xf32> to vector<16x24xbf16>
    %c0_1 = arith.constant 0 : index
    %c0_2 = arith.constant 0 : index
    %2 = vector.load %arg2[%c0_1, %c0_2] : memref<24x512xbf16, #tpu.memory_space<vmem>>, vector<24x512xbf16>
    %cst = arith.constant dense<0.000000e+00> : vector<16x512xf32>
    %3 = tpu.matmul %1, %2, %cst {dimension_numbers = #tpu.dot_dimension_numbers<[1], [0], [0], [1], [0, 0, 1, 1], [], []>} : vector<16x24xbf16>, vector<24x512xbf16>, vector<16x512xf32> -> vector<16x512xf32>
    %c0_3 = arith.constant 0 : index
    %c0_4 = arith.constant 0 : index
    %4 = vector.load %arg3[%c0_3, %c0_4] : memref<1x512xf32, #tpu.memory_space<vmem>>, vector<1x512xf32>
    %5 = vector.broadcast %4 : vector<1x512xf32> to vector<16x512xf32>
    %6 = arith.addf %3, %5 : vector<16x512xf32>
    %cst_5 = arith.constant 0.000000e+00 : f32
    %7 = vector.broadcast %cst_5 : f32 to vector<16x512xf32>
    %8 = arith.maximumf %6, %7 : vector<16x512xf32>
    %9 = arith.truncf %8 : vector<16x512xf32> to vector<16x512xbf16>
    %c0_6 = arith.constant 0 : index
    %c0_7 = arith.constant 0 : index
    %10 = vector.load %arg4[%c0_6, %c0_7] : memref<512x384xbf16, #tpu.memory_space<vmem>>, vector<512x384xbf16>
    %cst_8 = arith.constant dense<0.000000e+00> : vector<16x384xf32>
    %11 = tpu.matmul %9, %10, %cst_8 {dimension_numbers = #tpu.dot_dimension_numbers<[1], [0], [0], [1], [0, 0, 1, 1], [], []>} : vector<16x512xbf16>, vector<512x384xbf16>, vector<16x384xf32> -> vector<16x384xf32>
    %c0_9 = arith.constant 0 : index
    %c0_10 = arith.constant 0 : index
    %12 = vector.load %arg5[%c0_9, %c0_10] : memref<1x384xf32, #tpu.memory_space<vmem>>, vector<1x384xf32>
    %13 = vector.broadcast %12 : vector<1x384xf32> to vector<16x384xf32>
    %14 = arith.addf %11, %13 : vector<16x384xf32>
    %cst_11 = arith.constant 0.000000e+00 : f32
    %15 = vector.broadcast %cst_11 : f32 to vector<16x384xf32>
    %16 = arith.maximumf %14, %15 : vector<16x384xf32>
    %17 = arith.truncf %16 : vector<16x384xf32> to vector<16x384xbf16>
    %c0_12 = arith.constant 0 : index
    %c0_13 = arith.constant 0 : index
    %18 = vector.load %arg6[%c0_12, %c0_13] : memref<384x128xbf16, #tpu.memory_space<vmem>>, vector<384x128xbf16>
    %cst_14 = arith.constant dense<0.000000e+00> : vector<16x128xf32>
    %19 = tpu.matmul %17, %18, %cst_14 {dimension_numbers = #tpu.dot_dimension_numbers<[1], [0], [0], [1], [0, 0, 1, 1], [], []>} : vector<16x384xbf16>, vector<384x128xbf16>, vector<16x128xf32> -> vector<16x128xf32>
    %c0_15 = arith.constant 0 : index
    %c0_16 = arith.constant 0 : index
    %20 = vector.load %arg7[%c0_15, %c0_16] : memref<1x128xf32, #tpu.memory_space<vmem>>, vector<1x128xf32>
    %21 = vector.broadcast %20 : vector<1x128xf32> to vector<16x128xf32>
    %22 = arith.addf %19, %21 : vector<16x128xf32>
    %23 = math.tanh %22 : vector<16x128xf32>
    %cst_17 = arith.constant 1.000000e+00 : f32
    %24 = vector.broadcast %cst_17 : f32 to vector<16x128xf32>
    %25 = arith.mulf %24, %23 : vector<16x128xf32>
    %c0_18 = arith.constant 0 : index
    %c0_19 = arith.constant 0 : index
    %26 = vector.load %arg8[%c0_18, %c0_19] : memref<16x128xf32, #tpu.memory_space<vmem>>, vector<16x128xf32>
    tpu.vector_store %arg8[%c0_18, %c0_19], %25 {strides = array<i32>} : memref<16x128xf32, #tpu.memory_space<vmem>>, vector<16x128xf32>,
    return
  }
  func.func @transform_0(%arg0: i32) -> (i32, i32) {
    %c0_i32 = arith.constant 0 : i32
    %c0_i32_0 = arith.constant 0 : i32
    return %arg0, %c0_i32 : i32, i32
  }
  func.func @transform_1(%arg0: i32) -> (i32, i32) {
    %c0_i32 = arith.constant 0 : i32
    %c0_i32_0 = arith.constant 0 : i32
    %c0_i32_1 = arith.constant 0 : i32
    return %c0_i32, %c0_i32_0 : i32, i32
  }
  func.func @transform_2(%arg0: i32) -> (i32, i32) {
    %c0_i32 = arith.constant 0 : i32
    %c0_i32_0 = arith.constant 0 : i32
    %c0_i32_1 = arith.constant 0 : i32
    return %c0_i32, %c0_i32_0 : i32, i32
  }
  func.func @transform_3(%arg0: i32) -> (i32, i32) {
    %c0_i32 = arith.constant 0 : i32
    %c0_i32_0 = arith.constant 0 : i32
    %c0_i32_1 = arith.constant 0 : i32
    return %c0_i32, %c0_i32_0 : i32, i32
  }
  func.func @transform_4(%arg0: i32) -> (i32, i32) {
    %c0_i32 = arith.constant 0 : i32
    %c0_i32_0 = arith.constant 0 : i32
    %c0_i32_1 = arith.constant 0 : i32
    return %c0_i32, %c0_i32_0 : i32, i32
  }
  func.func @transform_5(%arg0: i32) -> (i32, i32) {
    %c0_i32 = arith.constant 0 : i32
    %c0_i32_0 = arith.constant 0 : i32
    %c0_i32_1 = arith.constant 0 : i32
    return %c0_i32, %c0_i32_0 : i32, i32
  }
  func.func @transform_6(%arg0: i32) -> (i32, i32) {
    %c0_i32 = arith.constant 0 : i32
    %c0_i32_0 = arith.constant 0 : i32
    %c0_i32_1 = arith.constant 0 : i32
    return %c0_i32, %c0_i32_0 : i32, i32
  }
  func.func @transform_7(%arg0: i32) -> (i32, i32) {
    %c0_i32 = arith.constant 0 : i32
    %c0_i32_0 = arith.constant 0 : i32
    return %arg0, %c0_i32 : i32, i32
  }
}

</mosaic_0001>

<llo_original>
// kernel: actor_forward.1
$region0: #{actor_forward.1}
  #allocation0 [shape = 'u32[]', space=smem, size = 0x4, offset = 0x4, fixed_abs, tag = 'smem constant byte address 0x4 - core index']
  #allocation1 [shape = 'u32[144,128]{1,0:T(1,128)}', space=vmem, size = 0x12000, scoped, tag = 'internal scratch']
  %s0 = inlined_call_operand.vmem [shape: f32[16,24], index: 0, kind: input, shape index: {}]
  %s1 = inlined_call_operand.hbm [shape: bf16[24,512], index: 1, kind: input, shape index: {}]
  %s2 = inlined_call_operand.vmem [shape: f32[1,512], index: 2, kind: input, shape index: {}]
  %s3 = inlined_call_operand.hbm [shape: bf16[512,384], index: 3, kind: input, shape index: {}]
  %s4 = inlined_call_operand.vmem [shape: f32[1,384], index: 4, kind: input, shape index: {}]
  %s5 = inlined_call_operand.hbm [shape: bf16[384,128], index: 5, kind: input, shape index: {}]
  %s6 = inlined_call_operand.vmem [shape: f32[1,128], index: 6, kind: input, shape index: {}]
  %s7 = inlined_call_operand.vmem [shape: f32[16,128], index: 7, kind: output, shape index: {}]
  %s8 = sld [smem:[#allocation0]]
  $region50: #{actor_forward.1} parent=0
    _
  %s10 = ssub.s32 1, %s8
  %s11 = scalar_select 0, %s10, %s8
  $region1: #{actor_forward.1} parent=0
    #allocation2 [shape = 'u8[24576]{0}', space=vmem, size = 0x6000, scoped, tag = 'input window, operand 1, single buffered']
    #allocation3 [shape = 's32[1]{0}', space=sflag, size = 0x4, scoped, tag = 'scoped memory for actor_forward.1']
    #allocation4 [shape = 'u8[393216]{0}', space=vmem, size = 0x60000, scoped, tag = 'input window, operand 3, single buffered']
    #allocation5 [shape = 's32[1]{0}', space=sflag, size = 0x4, scoped, tag = 'scoped memory for actor_forward.1']
    #allocation6 [shape = 'u8[98304]{0}', space=vmem, size = 0x18000, scoped, tag = 'input window, operand 5, single buffered']
    %12 = vsyncpa [#allocation3], 0
    %13 = vsyncpa [#allocation5], 0
    // Predicated region
    $region2: #{actor_forward.1} parent=1 // pred_check
      _
    $region3: #{actor_forward.1} parent=1 // pred_check_branch
      %15 = sbr.rel (0) target = $region5
    $region4: #{actor_forward.1} parent=1 // pred_region
      _
    $region5: #{actor_forward.1} parent=1 // pred_fallthru
      _
    // Predicated region
    $region6: #{actor_forward.1} parent=1 // pred_check
      _
    $region7: #{actor_forward.1} parent=1 // pred_check_branch
      %17 = sbr.rel (0) target = $region9
    $region8: #{actor_forward.1} parent=1 // pred_region
      %s19 = ssub.s32 768, 768
      %20 = vsyncadd [#allocation3], %s19
      %s21 = sshll.u32 [#allocation2], 4
      %s22 = int_to_ptr.vmem [resolvable:$true] %s21
      %27 = dma.hbm_to_vmem [thread:$0]  %s1, 768, %s22, [#allocation3], 256, 256, 16
    $region9: #{actor_forward.1} parent=1 // pred_fallthru
      _
    // Predicated region
    $region10: #{actor_forward.1} parent=1 // pred_check
      _
    $region11: #{actor_forward.1} parent=1 // pred_check_branch
      %29 = sbr.rel (0) target = $region13
    $region12: #{actor_forward.1} parent=1 // pred_region
      _
    $region13: #{actor_forward.1} parent=1 // pred_fallthru
      _
    // Predicated region
    $region14: #{actor_forward.1} parent=1 // pred_check
      _
    $region15: #{actor_forward.1} parent=1 // pred_check_branch
      %31 = sbr.rel (0) target = $region17
    $region16: #{actor_forward.1} parent=1 // pred_region
      %s33 = ssub.s32 12288, 12288
      %34 = vsyncadd [#allocation5], %s33
      %s35 = sshll.u32 [#allocation4], 4
      %s36 = int_to_ptr.vmem [resolvable:$true] %s35
      %41 = dma.hbm_to_vmem [thread:$0]  %s3, 12288, %s36, [#allocation5], 192, 192, 12
    $region17: #{actor_forward.1} parent=1 // pred_fallthru
      _
    // Predicated region
    $region18: #{actor_forward.1} parent=1 // pred_check
      _
    $region19: #{actor_forward.1} parent=1 // pred_check_branch
      %43 = sbr.rel (0) target = $region21
    $region20: #{actor_forward.1} parent=1 // pred_region
      _
    $region21: #{actor_forward.1} parent=1 // pred_fallthru
      _
    // Predicated region
    $region22: #{actor_forward.1} parent=1 // pred_check
      _
    $region23: #{actor_forward.1} parent=1 // pred_check_branch
      %45 = sbr.rel (0) target = $region25
    $region24: #{actor_forward.1} parent=1 // pred_region
      %s47 = ssub.s32 3072, 3072
      %48 = vsyncadd [#allocation5], %s47
      %s49 = sshll.u32 [#allocation6], 4
      %s50 = int_to_ptr.vmem [resolvable:$true] %s49
      %55 = dma.hbm_to_vmem [thread:$0]  %s5, 3072, %s50, [#allocation5], 64, 64, 4
    $region25: #{actor_forward.1} parent=1 // pred_fallthru
      _
    // Predicated region
    $region26: #{actor_forward.1} parent=1 // pred_check
      _
    $region27: #{actor_forward.1} parent=1 // pred_check_branch
      %57 = sbr.rel (0) target = $region29
    $region28: #{actor_forward.1} parent=1 // pred_region
      _
    $region29: #{actor_forward.1} parent=1 // pred_fallthru
      _
    // Predicated region
    $region30: #{actor_forward.1} parent=1 // pred_check
      _
    $region31: #{actor_forward.1} parent=1 // pred_check_branch
      %59 = sbr.rel (0) target = $region33
    $region32: #{actor_forward.1} parent=1 // pred_region
      %60 = dma.done [#allocation3], 768
    $region33: #{actor_forward.1} parent=1 // pred_fallthru
      _
    // Predicated region
    $region34: #{actor_forward.1} parent=1 // pred_check
      _
    $region35: #{actor_forward.1} parent=1 // pred_check_branch
      %62 = sbr.rel (0) target = $region37
    $region36: #{actor_forward.1} parent=1 // pred_region
      %63 = dma.done [#allocation5], 12288
    $region37: #{actor_forward.1} parent=1 // pred_fallthru
      _
    // Predicated region
    $region38: #{actor_forward.1} parent=1 // pred_check
      _
    $region39: #{actor_forward.1} parent=1 // pred_check_branch
      %65 = sbr.rel (0) target = $region41
    $region40: #{actor_forward.1} parent=1 // pred_region
      %66 = dma.done [#allocation5], 3072
    $region41: #{actor_forward.1} parent=1 // pred_fallthru
      _
    %v68 = vld [vmem:[%s0] sm:$0xff]
    %v69 = vld [vmem:[%s0 + $0x8] sm:$0xff]
    %v70 = vpack.c.bf16 %v69, %v68
    %v71 = vld [vmem:[#allocation2] sm:$0xff]
    %v72 = vld [vmem:[#allocation2 + $0x8] sm:$0xff]
    %v73 = vld [vmem:[#allocation2 + $0x10] sm:$0xff]
    %v74 = vld [vmem:[#allocation2 + $0x18] sm:$0xff]
    %v75 = vld [vmem:[#allocation2 + $0x20] sm:$0xff]
    %v76 = vld [vmem:[#allocation2 + $0x28] sm:$0xff]
    %v77 = vld [vmem:[%s2] sm:$0xf]
    %v79 = vlaneseq
    %v80 = vshrl.u32 %v79, 7
    %v81 = vsub.s32 0, %v80
    %v82 = vrot.slane %v77, %v81
    %v83 = vlaneseq
    %v84 = vshrl.u32 %v83, 7
    %v85 = vsub.s32 1, %v84
    %v86 = vrot.slane %v77, %v85
    %v87 = vlaneseq
    %v88 = vshrl.u32 %v87, 7
    %v89 = vsub.s32 2, %v88
    %v90 = vrot.slane %v77, %v89
    %v91 = vlaneseq
    %v92 = vshrl.u32 %v91, 7
    %v93 = vsub.s32 3, %v92
    %v94 = vrot.slane %v77, %v93
    %v105 = vunpack.c.l.b16 %v71
    %v106 = vunpack.c.h.b16 %v71
    %v107 = vunpack.c.l.b16 %v72
    %v108 = vunpack.c.h.b16 %v72
    %v109 = vunpack.c.l.b16 %v73
    %v110 = vunpack.c.h.b16 %v73
    %v111 = vunpack.c.l.b16 %v74
    %v112 = vunpack.c.h.b16 %v74
    %v113 = vunpack.c.l.b16 %v75
    %v114 = vunpack.c.h.b16 %v75
    %v115 = vunpack.c.l.b16 %v76
    %v116 = vunpack.c.h.b16 %v76
    %v117 = vpack.c.b16 %v109, %v105
    %v118 = vpack.c.b16 %v110, %v106
    %v119 = vpack.c.b16 %v111, %v107
    %v120 = vpack.c.b16 %v112, %v108
    %v121 = vpack.c.b16 %v113, %v113
    %v122 = vpack.c.b16 %v114, %v114
    %v123 = vpack.c.b16 %v115, %v115
    %v124 = vpack.c.b16 %v116, %v116
    %vm129 = vcmask 195584
    %v131 = vsel %vm129, %v70, 0
    %vm133 = vcmask 1043456
    %v135 = vsel %vm133, %v121, 0
    %v138 = vsel %vm133, %v122, 0
    %v141 = vsel %vm133, %v123, 0
    %v144 = vsel %vm133, %v124, 0
    %146 = vmatprep.subr.bf16.mxu0 %v118
    %147 = vmatpush1.bf16.msra.mxu0 %v117
    %148 = vmatprep.subr.bf16.mxu0 %v138
    %149 = vmatpush1.bf16.msra.mxu0 %v135
    %150 = vmatprep.subr.bf16.mxu0 0
    %151 = vmatpush1.bf16.msra.mxu0 0
    %152 = vmatprep.subr.bf16.mxu0 0
    %153 = vmatpush1.bf16.msra.mxu0 0
    %154 = vmatprep.subr.bf16.mxu0 0
    %155 = vmatpush1.bf16.msra.mxu0 0
    %156 = vmatprep.subr.bf16.mxu0 0
    %157 = vmatpush1.bf16.msra.mxu0 0
    %158 = vmatprep.subr.bf16.mxu0 0
    %159 = vmatpush1.bf16.msra.mxu0 0
    %160 = vmatprep.subr.bf16.mxu0 0
    %161 = vmatpush1.bf16.msra.mxu0 0
    %162 = vmatprep.subr.bf16.mxu0 0
    %163 = vmatpush1.bf16.msra.mxu0 0
    %164 = vmatprep.subr.bf16.mxu0 0
    %165 = vmatpush1.bf16.msra.mxu0 0
    %166 = vmatprep.subr.bf16.mxu0 0
    %167 = vmatpush1.bf16.msra.mxu0 0
    %168 = vmatprep.subr.bf16.mxu0 0
    %169 = vmatpush1.bf16.msra.mxu0 0
    %170 = vmatprep.subr.bf16.mxu0 0
    %171 = vmatpush1.bf16.msra.mxu0 0
    %172 = vmatprep.subr.bf16.mxu0 0
    %173 = vmatpush1.bf16.msra.mxu0 0
    %174 = vmatprep.subr.bf16.mxu0 0
    %175 = vmatpush1.bf16.msra.mxu0 0
    %176 = vmatprep.subr.bf16.mxu0 0
    %177 = vmatpush1.bf16.msra.mxu0 0
    %178 = vmatprep.mubr.bf16.mxu0 0
    %179 = vmatmul.mubr.bf16.gmra.mrb[0].mxu0 %v131
    %v180 = vpop.f32.mrb[0].mxu0
    %v181 = vadd.f32 %v82, %v180
    %v182 = vpop.f32.mrb[0].mxu0
    %v183 = vadd.f32 %v86, %v182
    %v184 = vpop.f32.mrb[0].mxu0
    %v185 = vadd.f32 %v82, %v184
    %v186 = vpop.f32.mrb[0].mxu0
    %v187 = vadd.f32 %v86, %v186
    %188 = vdwg.mxu0
    %189 = vmatprep.subr.bf16.mxu0 %v120
    %190 = vmatpush1.bf16.msra.mxu0 %v119
    %191 = vmatprep.subr.bf16.mxu0 %v144
    %192 = vmatpush1.bf16.msra.mxu0 %v141
    %193 = vmatprep.subr.bf16.mxu0 0
    %194 = vmatpush1.bf16.msra.mxu0 0
    %195 = vmatprep.subr.bf16.mxu0 0
    %196 = vmatpush1.bf16.msra.mxu0 0
    %197 = vmatprep.subr.bf16.mxu0 0
    %198 = vmatpush1.bf16.msra.mxu0 0
    %199 = vmatprep.subr.bf16.mxu0 0
    %200 = vmatpush1.bf16.msra.mxu0 0
    %201 = vmatprep.subr.bf16.mxu0 0
    %202 = vmatpush1.bf16.msra.mxu0 0
    %203 = vmatprep.subr.bf16.mxu0 0
    %204 = vmatpush1.bf16.msra.mxu0 0
    %205 = vmatprep.subr.bf16.mxu0 0
    %206 = vmatpush1.bf16.msra.mxu0 0
    %207 = vmatprep.subr.bf16.mxu0 0
    %208 = vmatpush1.bf16.msra.mxu0 0
    %209 = vmatprep.subr.bf16.mxu0 0
    %210 = vmatpush1.bf16.msra.mxu0 0
    %211 = vmatprep.subr.bf16.mxu0 0
    %212 = vmatpush1.bf16.msra.mxu0 0
    %213 = vmatprep.subr.bf16.mxu0 0
    %214 = vmatpush1.bf16.msra.mxu0 0
    %215 = vmatprep.subr.bf16.mxu0 0
    %216 = vmatpush1.bf16.msra.mxu0 0
    %217 = vmatprep.subr.bf16.mxu0 0
    %218 = vmatpush1.bf16.msra.mxu0 0
    %219 = vmatprep.subr.bf16.mxu0 0
    %220 = vmatpush1.bf16.msra.mxu0 0
    %221 = vmatprep.mubr.bf16.mxu0 0
    %222 = vmatmul.mubr.bf16.gmra.mrb[0].mxu0 %v131
    %v223 = vpop.f32.mrb[0].mxu0
    %v224 = vadd.f32 %v90, %v223
    %v225 = vpop.f32.mrb[0].mxu0
    %v226 = vadd.f32 %v94, %v225
    %v227 = vpop.f32.mrb[0].mxu0
    %v228 = vadd.f32 %v90, %v227
    %v229 = vpop.f32.mrb[0].mxu0
    %v230 = vadd.f32 %v94, %v229
    %231 = vdwg.mxu0
    %v232 = vmax.f32 %v181, 0.0
    %v233 = vmax.f32 %v183, 0.0
    %v234 = vmax.f32 %v224, 0.0
    %v235 = vmax.f32 %v226, 0.0
    %v236 = vmax.f32 %v185, 0.0
    %v237 = vmax.f32 %v187, 0.0
    %v238 = vmax.f32 %v228, 0.0
    %v239 = vmax.f32 %v230, 0.0
    %v240 = vpack.c.bf16 %v236, %v232
    %v241 = vpack.c.bf16 %v237, %v233
    %v242 = vpack.c.bf16 %v238, %v234
    %v243 = vpack.c.bf16 %v239, %v235
    %v244 = vld [vmem:[#allocation4] sm:$0xff]
    %v245 = vld [vmem:[#allocation4 + $0x8] sm:$0xf]
    %v246 = vld [vmem:[#allocation4 + $0xc] sm:$0xff]
    %v247 = vld [vmem:[#allocation4 + $0x14] sm:$0xf]
    %v248 = vld [vmem:[#allocation4 + $0x18] sm:$0xff]
    %v249 = vld [vmem:[#allocation4 + $0x20] sm:$0xf]
    %v250 = vld [vmem:[#allocation4 + $0x24] sm:$0xff]
    %v251 = vld [vmem:[#allocation4 + $0x2c] sm:$0xf]
    %v252 = vld [vmem:[#allocation4 + $0x30] sm:$0xff]
    %v253 = vld [vmem:[#allocation4 + $0x38] sm:$0xf]
    %v254 = vld [vmem:[#allocation4 + $0x3c] sm:$0xff]
    %v255 = vld [vmem:[#allocation4 + $0x44] sm:$0xf]
    %v256 = vld [vmem:[#allocation4 + $0x48] sm:$0xff]
    %v257 = vld [vmem:[#allocation4 + $0x50] sm:$0xf]
    %v258 = vld [vmem:[#allocation4 + $0x54] sm:$0xff]
    %v259 = vld [vmem:[#allocation4 + $0x5c] sm:$0xf]
    %v260 = vld [vmem:[#allocation4 + $0x60] sm:$0xff]
    %v261 = vld [vmem:[#allocation4 + $0x68] sm:$0xf]
    %v262 = vld [vmem:[#allocation4 + $0x6c] sm:$0xff]
    %v263 = vld [vmem:[#allocation4 + $0x74] sm:$0xf]
    %v264 = vld [vmem:[#allocation4 + $0x78] sm:$0xff]
    %v265 = vld [vmem:[#allocation4 + $0x80] sm:$0xf]
    %v266 = vld [vmem:[#allocation4 + $0x84] sm:$0xff]
    %v267 = vld [vmem:[#allocation4 + $0x8c] sm:$0xf]
    %v268 = vld [vmem:[#allocation4 + $0x90] sm:$0xff]
    %v269 = vld [vmem:[#allocation4 + $0x98] sm:$0xf]
    %v270 = vld [vmem:[#allocation4 + $0x9c] sm:$0xff]
    %v271 = vld [vmem:[#allocation4 + $0xa4] sm:$0xf]
    %v272 = vld [vmem:[#allocation4 + $0xa8] sm:$0xff]
    %v273 = vld [vmem:[#allocation4 + $0xb0] sm:$0xf]
    %v274 = vld [vmem:[#allocation4 + $0xb4] sm:$0xff]
    %v275 = vld [vmem:[#allocation4 + $0xbc] sm:$0xf]
    %v276 = vld [vmem:[#allocation4 + $0xc0] sm:$0xff]
    %v277 = vld [vmem:[#allocation4 + $0xc8] sm:$0xf]
    %v278 = vld [vmem:[#allocation4 + $0xcc] sm:$0xff]
    %v279 = vld [vmem:[#allocation4 + $0xd4] sm:$0xf]
    %v280 = vld [vmem:[#allocation4 + $0xd8] sm:$0xff]
    %v281 = vld [vmem:[#allocation4 + $0xe0] sm:$0xf]
    %v282 = vld [vmem:[#allocation4 + $0xe4] sm:$0xff]
    %v283 = vld [vmem:[#allocation4 + $0xec] sm:$0xf]
    %v284 = vld [vmem:[#allocation4 + $0xf0] sm:$0xff]
    %v285 = vld [vmem:[#allocation4 + $0xf8] sm:$0xf]
    %v286 = vld [vmem:[#allocation4 + $0xfc] sm:$0xff]
    %v287 = vld [vmem:[#allocation4 + $0x104] sm:$0xf]
    %v288 = vld [vmem:[#allocation4 + $0x108] sm:$0xff]
    %v289 = vld [vmem:[#allocation4 + $0x110] sm:$0xf]
    %v290 = vld [vmem:[#allocation4 + $0x114] sm:$0xff]
    %v291 = vld [vmem:[#allocation4 + $0x11c] sm:$0xf]
    %v292 = vld [vmem:[#allocation4 + $0x120] sm:$0xff]
    %v293 = vld [vmem:[#allocation4 + $0x128] sm:$0xf]
    %v294 = vld [vmem:[#allocation4 + $0x12c] sm:$0xff]
    %v295 = vld [vmem:[#allocation4 + $0x134] sm:$0xf]
    %v296 = vld [vmem:[#allocation4 + $0x138] sm:$0xff]
    %v297 = vld [vmem:[#allocation4 + $0x140] sm:$0xf]
    %v298 = vld [vmem:[#allocation4 + $0x144] sm:$0xff]
    %v299 = vld [vmem:[#allocation4 + $0x14c] sm:$0xf]
    %v300 = vld [vmem:[#allocation4 + $0x150] sm:$0xff]
    %v301 = vld [vmem:[#allocation4 + $0x158] sm:$0xf]
    %v302 = vld [vmem:[#allocation4 + $0x15c] sm:$0xff]
    %v303 = vld [vmem:[#allocation4 + $0x164] sm:$0xf]
    %v304 = vld [vmem:[#allocation4 + $0x168] sm:$0xff]
    %v305 = vld [vmem:[#allocation4 + $0x170] sm:$0xf]
    %v306 = vld [vmem:[#allocation4 + $0x174] sm:$0xff]
    %v307 = vld [vmem:[#allocation4 + $0x17c] sm:$0xf]
    %v308 = vld [vmem:[#allocation4 + $0x180] sm:$0xff]
    %v309 = vld [vmem:[#allocation4 + $0x188] sm:$0xf]
    %v310 = vld [vmem:[#allocation4 + $0x18c] sm:$0xff]
    %v311 = vld [vmem:[#allocation4 + $0x194] sm:$0xf]
    %v312 = vld [vmem:[#allocation4 + $0x198] sm:$0xff]
    %v313 = vld [vmem:[#allocation4 + $0x1a0] sm:$0xf]
    %v314 = vld [vmem:[#allocation4 + $0x1a4] sm:$0xff]
    %v315 = vld [vmem:[#allocation4 + $0x1ac] sm:$0xf]
    %v316 = vld [vmem:[#allocation4 + $0x1b0] sm:$0xff]
    %v317 = vld [vmem:[#allocation4 + $0x1b8] sm:$0xf]
    %v318 = vld [vmem:[#allocation4 + $0x1bc] sm:$0xff]
    %v319 = vld [vmem:[#allocation4 + $0x1c4] sm:$0xf]
    %v320 = vld [vmem:[#allocation4 + $0x1c8] sm:$0xff]
    %v321 = vld [vmem:[#allocation4 + $0x1d0] sm:$0xf]
    %v322 = vld [vmem:[#allocation4 + $0x1d4] sm:$0xff]
    %v323 = vld [vmem:[#allocation4 + $0x1dc] sm:$0xf]
    %v324 = vld [vmem:[#allocation4 + $0x1e0] sm:$0xff]
    %v325 = vld [vmem:[#allocation4 + $0x1e8] sm:$0xf]
    %v326 = vld [vmem:[#allocation4 + $0x1ec] sm:$0xff]
    %v327 = vld [vmem:[#allocation4 + $0x1f4] sm:$0xf]
    %v328 = vld [vmem:[#allocation4 + $0x1f8] sm:$0xff]
    %v329 = vld [vmem:[#allocation4 + $0x200] sm:$0xf]
    %v330 = vld [vmem:[#allocation4 + $0x204] sm:$0xff]
    %v331 = vld [vmem:[#allocation4 + $0x20c] sm:$0xf]
    %v332 = vld [vmem:[#allocation4 + $0x210] sm:$0xff]
    %v333 = vld [vmem:[#allocation4 + $0x218] sm:$0xf]
    %v334 = vld [vmem:[#allocation4 + $0x21c] sm:$0xff]
    %v335 = vld [vmem:[#allocation4 + $0x224] sm:$0xf]
    %v336 = vld [vmem:[#allocation4 + $0x228] sm:$0xff]
    %v337 = vld [vmem:[#allocation4 + $0x230] sm:$0xf]
    %v338 = vld [vmem:[#allocation4 + $0x234] sm:$0xff]
    %v339 = vld [vmem:[#allocation4 + $0x23c] sm:$0xf]
    %v340 = vld [vmem:[#allocation4 + $0x240] sm:$0xff]
    %v341 = vld [vmem:[#allocation4 + $0x248] sm:$0xf]
    %v342 = vld [vmem:[#allocation4 + $0x24c] sm:$0xff]
    %v343 = vld [vmem:[#allocation4 + $0x254] sm:$0xf]
    %v344 = vld [vmem:[#allocation4 + $0x258] sm:$0xff]
    %v345 = vld [vmem:[#allocation4 + $0x260] sm:$0xf]
    %v346 = vld [vmem:[#allocation4 + $0x264] sm:$0xff]
    %v347 = vld [vmem:[#allocation4 + $0x26c] sm:$0xf]
    %v348 = vld [vmem:[#allocation4 + $0x270] sm:$0xff]
    %v349 = vld [vmem:[#allocation4 + $0x278] sm:$0xf]
    %v350 = vld [vmem:[#allocation4 + $0x27c] sm:$0xff]
    %v351 = vld [vmem:[#allocation4 + $0x284] sm:$0xf]
    %v352 = vld [vmem:[#allocation4 + $0x288] sm:$0xff]
    %v353 = vld [vmem:[#allocation4 + $0x290] sm:$0xf]
    %v354 = vld [vmem:[#allocation4 + $0x294] sm:$0xff]
    %v355 = vld [vmem:[#allocation4 + $0x29c] sm:$0xf]
    %v356 = vld [vmem:[#allocation4 + $0x2a0] sm:$0xff]
    %v357 = vld [vmem:[#allocation4 + $0x2a8] sm:$0xf]
    %v358 = vld [vmem:[#allocation4 + $0x2ac] sm:$0xff]
    %v359 = vld [vmem:[#allocation4 + $0x2b4] sm:$0xf]
    %v360 = vld [vmem:[#allocation4 + $0x2b8] sm:$0xff]
    %v361 = vld [vmem:[#allocation4 + $0x2c0] sm:$0xf]
    %v362 = vld [vmem:[#allocation4 + $0x2c4] sm:$0xff]
    %v363 = vld [vmem:[#allocation4 + $0x2cc] sm:$0xf]
    %v364 = vld [vmem:[#allocation4 + $0x2d0] sm:$0xff]
    %v365 = vld [vmem:[#allocation4 + $0x2d8] sm:$0xf]
    %v366 = vld [vmem:[#allocation4 + $0x2dc] sm:$0xff]
    %v367 = vld [vmem:[#allocation4 + $0x2e4] sm:$0xf]
    %v368 = vld [vmem:[#allocation4 + $0x2e8] sm:$0xff]
    %v369 = vld [vmem:[#allocation4 + $0x2f0] sm:$0xf]
    %v370 = vld [vmem:[#allocation4 + $0x2f4] sm:$0xff]
    %v371 = vld [vmem:[#allocation4 + $0x2fc] sm:$0xf]
    %v372 = vld [vmem:[%s4] sm:$0x7]
    %v374 = vlaneseq
    %v375 = vshrl.u32 %v374, 7
    %v376 = vsub.s32 0, %v375
    %v377 = vrot.slane %v372, %v376
    %v378 = vlaneseq
    %v379 = vshrl.u32 %v378, 7
    %v380 = vsub.s32 1, %v379
    %v381 = vrot.slane %v372, %v380
    %v382 = vlaneseq
    %v383 = vshrl.u32 %v382, 7
    %v384 = vsub.s32 2, %v383
    %v385 = vrot.slane %v372, %v384
    %v517 = vunpack.c.l.b16 %v244
    %v518 = vunpack.c.h.b16 %v244
    %v519 = vunpack.c.l.b16 %v245
    %v520 = vunpack.c.l.b16 %v246
    %v521 = vunpack.c.h.b16 %v246
    %v522 = vunpack.c.l.b16 %v247
    %v523 = vunpack.c.l.b16 %v248
    %v524 = vunpack.c.h.b16 %v248
    %v525 = vunpack.c.l.b16 %v249
    %v526 = vunpack.c.l.b16 %v250
    %v527 = vunpack.c.h.b16 %v250
    %v528 = vunpack.c.l.b16 %v251
    %v529 = vunpack.c.l.b16 %v252
    %v530 = vunpack.c.h.b16 %v252
    %v531 = vunpack.c.l.b16 %v253
    %v532 = vunpack.c.l.b16 %v254
    %v533 = vunpack.c.h.b16 %v254
    %v534 = vunpack.c.l.b16 %v255
    %v535 = vunpack.c.l.b16 %v256
    %v536 = vunpack.c.h.b16 %v256
    %v537 = vunpack.c.l.b16 %v257
    %v538 = vunpack.c.l.b16 %v258
    %v539 = vunpack.c.h.b16 %v258
    %v540 = vunpack.c.l.b16 %v259
    %v541 = vunpack.c.l.b16 %v260
    %v542 = vunpack.c.h.b16 %v260
    %v543 = vunpack.c.l.b16 %v261
    %v544 = vunpack.c.l.b16 %v262
    %v545 = vunpack.c.h.b16 %v262
    %v546 = vunpack.c.l.b16 %v263
    %v547 = vunpack.c.l.b16 %v264
    %v548 = vunpack.c.h.b16 %v264
    %v549 = vunpack.c.l.b16 %v265
    %v550 = vunpack.c.l.b16 %v266
    %v551 = vunpack.c.h.b16 %v266
    %v552 = vunpack.c.l.b16 %v267
    %v553 = vunpack.c.l.b16 %v268
    %v554 = vunpack.c.h.b16 %v268
    %v555 = vunpack.c.l.b16 %v269
    %v556 = vunpack.c.l.b16 %v270
    %v557 = vunpack.c.h.b16 %v270
    %v558 = vunpack.c.l.b16 %v271
    %v559 = vunpack.c.l.b16 %v272
    %v560 = vunpack.c.h.b16 %v272
    %v561 = vunpack.c.l.b16 %v273
    %v562 = vunpack.c.l.b16 %v274
    %v563 = vunpack.c.h.b16 %v274
    %v564 = vunpack.c.l.b16 %v275
    %v565 = vunpack.c.l.b16 %v276
    %v566 = vunpack.c.h.b16 %v276
    %v567 = vunpack.c.l.b16 %v277
    %v568 = vunpack.c.l.b16 %v278
    %v569 = vunpack.c.h.b16 %v278
    %v570 = vunpack.c.l.b16 %v279
    %v571 = vunpack.c.l.b16 %v280
    %v572 = vunpack.c.h.b16 %v280
    %v573 = vunpack.c.l.b16 %v281
    %v574 = vunpack.c.l.b16 %v282
    %v575 = vunpack.c.h.b16 %v282
    %v576 = vunpack.c.l.b16 %v283
    %v577 = vunpack.c.l.b16 %v284
    %v578 = vunpack.c.h.b16 %v284
    %v579 = vunpack.c.l.b16 %v285
    %v580 = vunpack.c.l.b16 %v286
    %v581 = vunpack.c.h.b16 %v286
    %v582 = vunpack.c.l.b16 %v287
    %v583 = vunpack.c.l.b16 %v288
    %v584 = vunpack.c.h.b16 %v288
    %v585 = vunpack.c.l.b16 %v289
    %v586 = vunpack.c.l.b16 %v290
    %v587 = vunpack.c.h.b16 %v290
    %v588 = vunpack.c.l.b16 %v291
    %v589 = vunpack.c.l.b16 %v292
    %v590 = vunpack.c.h.b16 %v292
    %v591 = vunpack.c.l.b16 %v293
    %v592 = vunpack.c.l.b16 %v294
    %v593 = vunpack.c.h.b16 %v294
    %v594 = vunpack.c.l.b16 %v295
    %v595 = vunpack.c.l.b16 %v296
    %v596 = vunpack.c.h.b16 %v296
    %v597 = vunpack.c.l.b16 %v297
    %v598 = vunpack.c.l.b16 %v298
    %v599 = vunpack.c.h.b16 %v298
    %v600 = vunpack.c.l.b16 %v299
    %v601 = vunpack.c.l.b16 %v300
    %v602 = vunpack.c.h.b16 %v300
    %v603 = vunpack.c.l.b16 %v301
    %v604 = vunpack.c.l.b16 %v302
    %v605 = vunpack.c.h.b16 %v302
    %v606 = vunpack.c.l.b16 %v303
    %v607 = vunpack.c.l.b16 %v304
    %v608 = vunpack.c.h.b16 %v304
    %v609 = vunpack.c.l.b16 %v305
    %v610 = vunpack.c.l.b16 %v306
    %v611 = vunpack.c.h.b16 %v306
    %v612 = vunpack.c.l.b16 %v307
    %v613 = vunpack.c.l.b16 %v308
    %v614 = vunpack.c.h.b16 %v308
    %v615 = vunpack.c.l.b16 %v309
    %v616 = vunpack.c.l.b16 %v310
    %v617 = vunpack.c.h.b16 %v310
    %v618 = vunpack.c.l.b16 %v311
    %v619 = vunpack.c.l.b16 %v312
    %v620 = vunpack.c.h.b16 %v312
    %v621 = vunpack.c.l.b16 %v313
    %v622 = vunpack.c.l.b16 %v314
    %v623 = vunpack.c.h.b16 %v314
    %v624 = vunpack.c.l.b16 %v315
    %v625 = vunpack.c.l.b16 %v316
    %v626 = vunpack.c.h.b16 %v316
    %v627 = vunpack.c.l.b16 %v317
    %v628 = vunpack.c.l.b16 %v318
    %v629 = vunpack.c.h.b16 %v318
    %v630 = vunpack.c.l.b16 %v319
    %v631 = vunpack.c.l.b16 %v320
    %v632 = vunpack.c.h.b16 %v320
    %v633 = vunpack.c.l.b16 %v321
    %v634 = vunpack.c.l.b16 %v322
    %v635 = vunpack.c.h.b16 %v322
    %v636 = vunpack.c.l.b16 %v323
    %v637 = vunpack.c.l.b16 %v324
    %v638 = vunpack.c.h.b16 %v324
    %v639 = vunpack.c.l.b16 %v325
    %v640 = vunpack.c.l.b16 %v326
    %v641 = vunpack.c.h.b16 %v326
    %v642 = vunpack.c.l.b16 %v327
    %v643 = vunpack.c.l.b16 %v328
    %v644 = vunpack.c.h.b16 %v328
    %v645 = vunpack.c.l.b16 %v329
    %v646 = vunpack.c.l.b16 %v330
    %v647 = vunpack.c.h.b16 %v330
    %v648 = vunpack.c.l.b16 %v331
    %v649 = vunpack.c.l.b16 %v332
    %v650 = vunpack.c.h.b16 %v332
    %v651 = vunpack.c.l.b16 %v333
    %v652 = vunpack.c.l.b16 %v334
    %v653 = vunpack.c.h.b16 %v334
    %v654 = vunpack.c.l.b16 %v335
    %v655 = vunpack.c.l.b16 %v336
    %v656 = vunpack.c.h.b16 %v336
    %v657 = vunpack.c.l.b16 %v337
    %v658 = vunpack.c.l.b16 %v338
    %v659 = vunpack.c.h.b16 %v338
    %v660 = vunpack.c.l.b16 %v339
    %v661 = vunpack.c.l.b16 %v340
    %v662 = vunpack.c.h.b16 %v340
    %v663 = vunpack.c.l.b16 %v341
    %v664 = vunpack.c.l.b16 %v342
    %v665 = vunpack.c.h.b16 %v342
    %v666 = vunpack.c.l.b16 %v343
    %v667 = vunpack.c.l.b16 %v344
    %v668 = vunpack.c.h.b16 %v344
    %v669 = vunpack.c.l.b16 %v345
    %v670 = vunpack.c.l.b16 %v346
    %v671 = vunpack.c.h.b16 %v346
    %v672 = vunpack.c.l.b16 %v347
    %v673 = vunpack.c.l.b16 %v348
    %v674 = vunpack.c.h.b16 %v348
    %v675 = vunpack.c.l.b16 %v349
    %v676 = vunpack.c.l.b16 %v350
    %v677 = vunpack.c.h.b16 %v350
    %v678 = vunpack.c.l.b16 %v351
    %v679 = vunpack.c.l.b16 %v352
    %v680 = vunpack.c.h.b16 %v352
    %v681 = vunpack.c.l.b16 %v353
    %v682 = vunpack.c.l.b16 %v354
    %v683 = vunpack.c.h.b16 %v354
    %v684 = vunpack.c.l.b16 %v355
    %v685 = vunpack.c.l.b16 %v356
    %v686 = vunpack.c.h.b16 %v356
    %v687 = vunpack.c.l.b16 %v357
    %v688 = vunpack.c.l.b16 %v358
    %v689 = vunpack.c.h.b16 %v358
    %v690 = vunpack.c.l.b16 %v359
    %v691 = vunpack.c.l.b16 %v360
    %v692 = vunpack.c.h.b16 %v360
    %v693 = vunpack.c.l.b16 %v361
    %v694 = vunpack.c.l.b16 %v362
    %v695 = vunpack.c.h.b16 %v362
    %v696 = vunpack.c.l.b16 %v363
    %v697 = vunpack.c.l.b16 %v364
    %v698 = vunpack.c.h.b16 %v364
    %v699 = vunpack.c.l.b16 %v365
    %v700 = vunpack.c.l.b16 %v366
    %v701 = vunpack.c.h.b16 %v366
    %v702 = vunpack.c.l.b16 %v367
    %v703 = vunpack.c.l.b16 %v368
    %v704 = vunpack.c.h.b16 %v368
    %v705 = vunpack.c.l.b16 %v369
    %v706 = vunpack.c.l.b16 %v370
    %v707 = vunpack.c.h.b16 %v370
    %v708 = vunpack.c.l.b16 %v371
    %v709 = vpack.c.b16 %v520, %v517
    %v710 = vpack.c.b16 %v521, %v518
    %v711 = vpack.c.b16 %v522, %v519
    %v712 = vpack.c.b16 %v526, %v523
    %v713 = vpack.c.b16 %v527, %v524
    %v714 = vpack.c.b16 %v528, %v525
    %v715 = vpack.c.b16 %v532, %v529
    %v716 = vpack.c.b16 %v533, %v530
    %v717 = vpack.c.b16 %v534, %v531
    %v718 = vpack.c.b16 %v538, %v535
    %v719 = vpack.c.b16 %v539, %v536
    %v720 = vpack.c.b16 %v540, %v537
    %v721 = vpack.c.b16 %v544, %v541
    %v722 = vpack.c.b16 %v545, %v542
    %v723 = vpack.c.b16 %v546, %v543
    %v724 = vpack.c.b16 %v550, %v547
    %v725 = vpack.c.b16 %v551, %v548
    %v726 = vpack.c.b16 %v552, %v549
    %v727 = vpack.c.b16 %v556, %v553
    %v728 = vpack.c.b16 %v557, %v554
    %v729 = vpack.c.b16 %v558, %v555
    %v730 = vpack.c.b16 %v562, %v559
    %v731 = vpack.c.b16 %v563, %v560
    %v732 = vpack.c.b16 %v564, %v561
    %v733 = vpack.c.b16 %v568, %v565
    %v734 = vpack.c.b16 %v569, %v566
    %v735 = vpack.c.b16 %v570, %v567
    %v736 = vpack.c.b16 %v574, %v571
    %v737 = vpack.c.b16 %v575, %v572
    %v738 = vpack.c.b16 %v576, %v573
    %v739 = vpack.c.b16 %v580, %v577
    %v740 = vpack.c.b16 %v581, %v578
    %v741 = vpack.c.b16 %v582, %v579
    %v742 = vpack.c.b16 %v586, %v583
    %v743 = vpack.c.b16 %v587, %v584
    %v744 = vpack.c.b16 %v588, %v585
    %v745 = vpack.c.b16 %v592, %v589
    %v746 = vpack.c.b16 %v593, %v590
    %v747 = vpack.c.b16 %v594, %v591
    %v748 = vpack.c.b16 %v598, %v595
    %v749 = vpack.c.b16 %v599, %v596
    %v750 = vpack.c.b16 %v600, %v597
    %v751 = vpack.c.b16 %v604, %v601
    %v752 = vpack.c.b16 %v605, %v602
    %v753 = vpack.c.b16 %v606, %v603
    %v754 = vpack.c.b16 %v610, %v607
    %v755 = vpack.c.b16 %v611, %v608
    %v756 = vpack.c.b16 %v612, %v609
    %v757 = vpack.c.b16 %v616, %v613
    %v758 = vpack.c.b16 %v617, %v614
    %v759 = vpack.c.b16 %v618, %v615
    %v760 = vpack.c.b16 %v622, %v619
    %v761 = vpack.c.b16 %v623, %v620
    %v762 = vpack.c.b16 %v624, %v621
    %v763 = vpack.c.b16 %v628, %v625
    %v764 = vpack.c.b16 %v629, %v626
    %v765 = vpack.c.b16 %v630, %v627
    %v766 = vpack.c.b16 %v634, %v631
    %v767 = vpack.c.b16 %v635, %v632
    %v768 = vpack.c.b16 %v636, %v633
    %v769 = vpack.c.b16 %v640, %v637
    %v770 = vpack.c.b16 %v641, %v638
    %v771 = vpack.c.b16 %v642, %v639
    %v772 = vpack.c.b16 %v646, %v643
    %v773 = vpack.c.b16 %v647, %v644
    %v774 = vpack.c.b16 %v648, %v645
    %v775 = vpack.c.b16 %v652, %v649
    %v776 = vpack.c.b16 %v653, %v650
    %v777 = vpack.c.b16 %v654, %v651
    %v778 = vpack.c.b16 %v658, %v655
    %v779 = vpack.c.b16 %v659, %v656
    %v780 = vpack.c.b16 %v660, %v657
    %v781 = vpack.c.b16 %v664, %v661
    %v782 = vpack.c.b16 %v665, %v662
    %v783 = vpack.c.b16 %v666, %v663
    %v784 = vpack.c.b16 %v670, %v667
    %v785 = vpack.c.b16 %v671, %v668
    %v786 = vpack.c.b16 %v672, %v669
    %v787 = vpack.c.b16 %v676, %v673
    %v788 = vpack.c.b16 %v677, %v674
    %v789 = vpack.c.b16 %v678, %v675
    %v790 = vpack.c.b16 %v682, %v679
    %v791 = vpack.c.b16 %v683, %v680
    %v792 = vpack.c.b16 %v684, %v681
    %v793 = vpack.c.b16 %v688, %v685
    %v794 = vpack.c.b16 %v689, %v686
    %v795 = vpack.c.b16 %v690, %v687
    %v796 = vpack.c.b16 %v694, %v691
    %v797 = vpack.c.b16 %v695, %v692
    %v798 = vpack.c.b16 %v696, %v693
    %v799 = vpack.c.b16 %v700, %v697
    %v800 = vpack.c.b16 %v701, %v698
    %v801 = vpack.c.b16 %v702, %v699
    %v802 = vpack.c.b16 %v706, %v703
    %v803 = vpack.c.b16 %v707, %v704
    %v804 = vpack.c.b16 %v708, %v705
    %901 = vmatprep.subr.bf16.mxu0 %v710
    %902 = vmatpush1.bf16.msra.mxu0 %v709
    %903 = vmatprep.subr.bf16.mxu0 %v713
    %904 = vmatpush1.bf16.msra.mxu0 %v712
    %905 = vmatprep.subr.bf16.mxu0 %v716
    %906 = vmatpush1.bf16.msra.mxu0 %v715
    %907 = vmatprep.subr.bf16.mxu0 %v719
    %908 = vmatpush1.bf16.msra.mxu0 %v718
    %909 = vmatprep.subr.bf16.mxu0 %v722
    %910 = vmatpush1.bf16.msra.mxu0 %v721
    %911 = vmatprep.subr.bf16.mxu0 %v725
    %912 = vmatpush1.bf16.msra.mxu0 %v724
    %913 = vmatprep.subr.bf16.mxu0 %v728
    %914 = vmatpush1.bf16.msra.mxu0 %v727
    %915 = vmatprep.subr.bf16.mxu0 %v731
    %916 = vmatpush1.bf16.msra.mxu0 %v730
    %917 = vmatprep.subr.bf16.mxu0 %v734
    %918 = vmatpush1.bf16.msra.mxu0 %v733
    %919 = vmatprep.subr.bf16.mxu0 %v737
    %920 = vmatpush1.bf16.msra.mxu0 %v736
    %921 = vmatprep.subr.bf16.mxu0 %v740
    %922 = vmatpush1.bf16.msra.mxu0 %v739
    %923 = vmatprep.subr.bf16.mxu0 %v743
    %924 = vmatpush1.bf16.msra.mxu0 %v742
    %925 = vmatprep.subr.bf16.mxu0 %v746
    %926 = vmatpush1.bf16.msra.mxu0 %v745
    %927 = vmatprep.subr.bf16.mxu0 %v749
    %928 = vmatpush1.bf16.msra.mxu0 %v748
    %929 = vmatprep.subr.bf16.mxu0 %v752
    %930 = vmatpush1.bf16.msra.mxu0 %v751
    %931 = vmatprep.subr.bf16.mxu0 %v755
    %932 = vmatpush1.bf16.msra.mxu0 %v754
    %933 = vmatprep.mubr.bf16.mxu0 %v241
    %934 = vmatmul.mubr.bf16.gmra.mrb[0].mxu0 %v240
    %v935 = vpop.f32.mrb[0].mxu0
    %v936 = vadd.f32 %v377, %v935
    %v937 = vpop.f32.mrb[0].mxu0
    %v938 = vadd.f32 %v381, %v937
    %v939 = vpop.f32.mrb[0].mxu0
    %v940 = vadd.f32 %v377, %v939
    %v941 = vpop.f32.mrb[0].mxu0
    %v942 = vadd.f32 %v381, %v941
    %943 = vdwg.mxu0
    %944 = vmatprep.subr.bf16.mxu0 %v758
    %945 = vmatpush1.bf16.msra.mxu0 %v757
    %946 = vmatprep.subr.bf16.mxu0 %v761
    %947 = vmatpush1.bf16.msra.mxu0 %v760
    %948 = vmatprep.subr.bf16.mxu0 %v764
    %949 = vmatpush1.bf16.msra.mxu0 %v763
    %950 = vmatprep.subr.bf16.mxu0 %v767
    %951 = vmatpush1.bf16.msra.mxu0 %v766
    %952 = vmatprep.subr.bf16.mxu0 %v770
    %953 = vmatpush1.bf16.msra.mxu0 %v769
    %954 = vmatprep.subr.bf16.mxu0 %v773
    %955 = vmatpush1.bf16.msra.mxu0 %v772
    %956 = vmatprep.subr.bf16.mxu0 %v776
    %957 = vmatpush1.bf16.msra.mxu0 %v775
    %958 = vmatprep.subr.bf16.mxu0 %v779
    %959 = vmatpush1.bf16.msra.mxu0 %v778
    %960 = vmatprep.subr.bf16.mxu0 %v782
    %961 = vmatpush1.bf16.msra.mxu0 %v781
    %962 = vmatprep.subr.bf16.mxu0 %v785
    %963 = vmatpush1.bf16.msra.mxu0 %v784
    %964 = vmatprep.subr.bf16.mxu0 %v788
    %965 = vmatpush1.bf16.msra.mxu0 %v787
    %966 = vmatprep.subr.bf16.mxu0 %v791
    %967 = vmatpush1.bf16.msra.mxu0 %v790
    %968 = vmatprep.subr.bf16.mxu0 %v794
    %969 = vmatpush1.bf16.msra.mxu0 %v793
    %970 = vmatprep.subr.bf16.mxu0 %v797
    %971 = vmatpush1.bf16.msra.mxu0 %v796
    %972 = vmatprep.subr.bf16.mxu0 %v800
    %973 = vmatpush1.bf16.msra.mxu0 %v799
    %974 = vmatprep.subr.bf16.mxu0 %v803
    %975 = vmatpush1.bf16.msra.mxu0 %v802
    %976 = vmatprep.mubr.bf16.mxu0 %v243
    %977 = vmatmul.mubr.bf16.gmra.mrb[0].mxu0 %v242
    %v978 = vpop.f32.mrb[0].mxu0
    %v979 = vadd.f32 %v936, %v978
    %v980 = vpop.f32.mrb[0].mxu0
    %v981 = vadd.f32 %v938, %v980
    %v982 = vpop.f32.mrb[0].mxu0
    %v983 = vadd.f32 %v940, %v982
    %v984 = vpop.f32.mrb[0].mxu0
    %v985 = vadd.f32 %v942, %v984
    %986 = vdwg.mxu0
    %987 = vmatprep.subr.bf16.mxu0 0
    %988 = vmatpush1.bf16.msra.mxu0 %v711
    %989 = vmatprep.subr.bf16.mxu0 0
    %990 = vmatpush1.bf16.msra.mxu0 %v714
    %991 = vmatprep.subr.bf16.mxu0 0
    %992 = vmatpush1.bf16.msra.mxu0 %v717
    %993 = vmatprep.subr.bf16.mxu0 0
    %994 = vmatpush1.bf16.msra.mxu0 %v720
    %995 = vmatprep.subr.bf16.mxu0 0
    %996 = vmatpush1.bf16.msra.mxu0 %v723
    %997 = vmatprep.subr.bf16.mxu0 0
    %998 = vmatpush1.bf16.msra.mxu0 %v726
    %999 = vmatprep.subr.bf16.mxu0 0
    %1000 = vmatpush1.bf16.msra.mxu0 %v729
    %1001 = vmatprep.subr.bf16.mxu0 0
    %1002 = vmatpush1.bf16.msra.mxu0 %v732
    %1003 = vmatprep.subr.bf16.mxu0 0
    %1004 = vmatpush1.bf16.msra.mxu0 %v735
    %1005 = vmatprep.subr.bf16.mxu0 0
    %1006 = vmatpush1.bf16.msra.mxu0 %v738
    %1007 = vmatprep.subr.bf16.mxu0 0
    %1008 = vmatpush1.bf16.msra.mxu0 %v741
    %1009 = vmatprep.subr.bf16.mxu0 0
    %1010 = vmatpush1.bf16.msra.mxu0 %v744
    %1011 = vmatprep.subr.bf16.mxu0 0
    %1012 = vmatpush1.bf16.msra.mxu0 %v747
    %1013 = vmatprep.subr.bf16.mxu0 0
    %1014 = vmatpush1.bf16.msra.mxu0 %v750
    %1015 = vmatprep.subr.bf16.mxu0 0
    %1016 = vmatpush1.bf16.msra.mxu0 %v753
    %1017 = vmatprep.subr.bf16.mxu0 0
    %1018 = vmatpush1.bf16.msra.mxu0 %v756
    %1019 = vmatprep.mubr.bf16.mxu0 %v241
    %1020 = vmatmul.mubr.bf16.gmra.mrb[0].mxu0 %v240
    %v1021 = vpop.f32.mrb[0].mxu0
    %v1022 = vadd.f32 %v385, %v1021
    %v1023 = vpop.f32.mrb[0].mxu0
    %v1024 = vpop.f32.mrb[0].mxu0
    %v1025 = vadd.f32 %v385, %v1024
    %v1026 = vpop.f32.mrb[0].mxu0
    %1027 = vdwg.mxu0
    %1028 = vmatprep.subr.bf16.mxu0 0
    %1029 = vmatpush1.bf16.msra.mxu0 %v759
    %1030 = vmatprep.subr.bf16.mxu0 0
    %1031 = vmatpush1.bf16.msra.mxu0 %v762
    %1032 = vmatprep.subr.bf16.mxu0 0
    %1033 = vmatpush1.bf16.msra.mxu0 %v765
    %1034 = vmatprep.subr.bf16.mxu0 0
    %1035 = vmatpush1.bf16.msra.mxu0 %v768
    %1036 = vmatprep.subr.bf16.mxu0 0
    %1037 = vmatpush1.bf16.msra.mxu0 %v771
    %1038 = vmatprep.subr.bf16.mxu0 0
    %1039 = vmatpush1.bf16.msra.mxu0 %v774
    %1040 = vmatprep.subr.bf16.mxu0 0
    %1041 = vmatpush1.bf16.msra.mxu0 %v777
    %1042 = vmatprep.subr.bf16.mxu0 0
    %1043 = vmatpush1.bf16.msra.mxu0 %v780
    %1044 = vmatprep.subr.bf16.mxu0 0
    %1045 = vmatpush1.bf16.msra.mxu0 %v783
    %1046 = vmatprep.subr.bf16.mxu0 0
    %1047 = vmatpush1.bf16.msra.mxu0 %v786
    %1048 = vmatprep.subr.bf16.mxu0 0
    %1049 = vmatpush1.bf16.msra.mxu0 %v789
    %1050 = vmatprep.subr.bf16.mxu0 0
    %1051 = vmatpush1.bf16.msra.mxu0 %v792
    %1052 = vmatprep.subr.bf16.mxu0 0
    %1053 = vmatpush1.bf16.msra.mxu0 %v795
    %1054 = vmatprep.subr.bf16.mxu0 0
    %1055 = vmatpush1.bf16.msra.mxu0 %v798
    %1056 = vmatprep.subr.bf16.mxu0 0
    %1057 = vmatpush1.bf16.msra.mxu0 %v801
    %1058 = vmatprep.subr.bf16.mxu0 0
    %1059 = vmatpush1.bf16.msra.mxu0 %v804
    %1060 = vmatprep.mubr.bf16.mxu0 %v243
    %1061 = vmatmul.mubr.bf16.gmra.mrb[0].mxu0 %v242
    %v1062 = vpop.f32.mrb[0].mxu0
    %v1063 = vadd.f32 %v1022, %v1062
    %v1064 = vpop.f32.mrb[0].mxu0
    %v1065 = vpop.f32.mrb[0].mxu0
    %v1066 = vadd.f32 %v1025, %v1065
    %v1067 = vpop.f32.mrb[0].mxu0
    %1068 = vdwg.mxu0
    %v1069 = vmax.f32 %v979, 0.0
    %v1070 = vmax.f32 %v981, 0.0
    %v1071 = vmax.f32 %v1063, 0.0
    %v1072 = vmax.f32 %v983, 0.0
    %v1073 = vmax.f32 %v985, 0.0
    %v1074 = vmax.f32 %v1066, 0.0
    %v1075 = vpack.c.bf16 %v1072, %v1069
    %v1076 = vpack.c.bf16 %v1073, %v1070
    %v1077 = vpack.c.bf16 %v1074, %v1071
    %v1078 = vld [vmem:[#allocation6] sm:$0xf]
    %v1079 = vld [vmem:[#allocation6 + $0x4] sm:$0xf]
    %v1080 = vld [vmem:[#allocation6 + $0x8] sm:$0xf]
    %v1081 = vld [vmem:[#allocation6 + $0xc] sm:$0xf]
    %v1082 = vld [vmem:[#allocation6 + $0x10] sm:$0xf]
    %v1083 = vld [vmem:[#allocation6 + $0x14] sm:$0xf]
    %v1084 = vld [vmem:[#allocation6 + $0x18] sm:$0xf]
    %v1085 = vld [vmem:[#allocation6 + $0x1c] sm:$0xf]
    %v1086 = vld [vmem:[#allocation6 + $0x20] sm:$0xf]
    %v1087 = vld [vmem:[#allocation6 + $0x24] sm:$0xf]
    %v1088 = vld [vmem:[#allocation6 + $0x28] sm:$0xf]
    %v1089 = vld [vmem:[#allocation6 + $0x2c] sm:$0xf]
    %v1090 = vld [vmem:[#allocation6 + $0x30] sm:$0xf]
    %v1091 = vld [vmem:[#allocation6 + $0x34] sm:$0xf]
    %v1092 = vld [vmem:[#allocation6 + $0x38] sm:$0xf]
    %v1093 = vld [vmem:[#allocation6 + $0x3c] sm:$0xf]
    %v1094 = vld [vmem:[#allocation6 + $0x40] sm:$0xf]
    %v1095 = vld [vmem:[#allocation6 + $0x44] sm:$0xf]
    %v1096 = vld [vmem:[#allocation6 + $0x48] sm:$0xf]
    %v1097 = vld [vmem:[#allocation6 + $0x4c] sm:$0xf]
    %v1098 = vld [vmem:[#allocation6 + $0x50] sm:$0xf]
    %v1099 = vld [vmem:[#allocation6 + $0x54] sm:$0xf]
    %v1100 = vld [vmem:[#allocation6 + $0x58] sm:$0xf]
    %v1101 = vld [vmem:[#allocation6 + $0x5c] sm:$0xf]
    %v1102 = vld [vmem:[#allocation6 + $0x60] sm:$0xf]
    %v1103 = vld [vmem:[#allocation6 + $0x64] sm:$0xf]
    %v1104 = vld [vmem:[#allocation6 + $0x68] sm:$0xf]
    %v1105 = vld [vmem:[#allocation6 + $0x6c] sm:$0xf]
    %v1106 = vld [vmem:[#allocation6 + $0x70] sm:$0xf]
    %v1107 = vld [vmem:[#allocation6 + $0x74] sm:$0xf]
    %v1108 = vld [vmem:[#allocation6 + $0x78] sm:$0xf]
    %v1109 = vld [vmem:[#allocation6 + $0x7c] sm:$0xf]
    %v1110 = vld [vmem:[#allocation6 + $0x80] sm:$0xf]
    %v1111 = vld [vmem:[#allocation6 + $0x84] sm:$0xf]
    %v1112 = vld [vmem:[#allocation6 + $0x88] sm:$0xf]
    %v1113 = vld [vmem:[#allocation6 + $0x8c] sm:$0xf]
    %v1114 = vld [vmem:[#allocation6 + $0x90] sm:$0xf]
    %v1115 = vld [vmem:[#allocation6 + $0x94] sm:$0xf]
    %v1116 = vld [vmem:[#allocation6 + $0x98] sm:$0xf]
    %v1117 = vld [vmem:[#allocation6 + $0x9c] sm:$0xf]
    %v1118 = vld [vmem:[#allocation6 + $0xa0] sm:$0xf]
    %v1119 = vld [vmem:[#allocation6 + $0xa4] sm:$0xf]
    %v1120 = vld [vmem:[#allocation6 + $0xa8] sm:$0xf]
    %v1121 = vld [vmem:[#allocation6 + $0xac] sm:$0xf]
    %v1122 = vld [vmem:[#allocation6 + $0xb0] sm:$0xf]
    %v1123 = vld [vmem:[#allocation6 + $0xb4] sm:$0xf]
    %v1124 = vld [vmem:[#allocation6 + $0xb8] sm:$0xf]
    %v1125 = vld [vmem:[#allocation6 + $0xbc] sm:$0xf]
    %v1126 = vld [vmem:[%s6] sm:$0x1]
    %v1128 = vlaneseq
    %v1129 = vshrl.u32 %v1128, 7
    %v1130 = vsub.s32 0, %v1129
    %v1131 = vrot.slane %v1126, %v1130
    %v1181 = vunpack.c.l.b16 %v1078
    %v1182 = vunpack.c.l.b16 %v1079
    %v1183 = vunpack.c.l.b16 %v1080
    %v1184 = vunpack.c.l.b16 %v1081
    %v1185 = vunpack.c.l.b16 %v1082
    %v1186 = vunpack.c.l.b16 %v1083
    %v1187 = vunpack.c.l.b16 %v1084
    %v1188 = vunpack.c.l.b16 %v1085
    %v1189 = vunpack.c.l.b16 %v1086
    %v1190 = vunpack.c.l.b16 %v1087
    %v1191 = vunpack.c.l.b16 %v1088
    %v1192 = vunpack.c.l.b16 %v1089
    %v1193 = vunpack.c.l.b16 %v1090
    %v1194 = vunpack.c.l.b16 %v1091
    %v1195 = vunpack.c.l.b16 %v1092
    %v1196 = vunpack.c.l.b16 %v1093
    %v1197 = vunpack.c.l.b16 %v1094
    %v1198 = vunpack.c.l.b16 %v1095
    %v1199 = vunpack.c.l.b16 %v1096
    %v1200 = vunpack.c.l.b16 %v1097
    %v1201 = vunpack.c.l.b16 %v1098
    %v1202 = vunpack.c.l.b16 %v1099
    %v1203 = vunpack.c.l.b16 %v1100
    %v1204 = vunpack.c.l.b16 %v1101
    %v1205 = vunpack.c.l.b16 %v1102
    %v1206 = vunpack.c.l.b16 %v1103
    %v1207 = vunpack.c.l.b16 %v1104
    %v1208 = vunpack.c.l.b16 %v1105
    %v1209 = vunpack.c.l.b16 %v1106
    %v1210 = vunpack.c.l.b16 %v1107
    %v1211 = vunpack.c.l.b16 %v1108
    %v1212 = vunpack.c.l.b16 %v1109
    %v1213 = vunpack.c.l.b16 %v1110
    %v1214 = vunpack.c.l.b16 %v1111
    %v1215 = vunpack.c.l.b16 %v1112
    %v1216 = vunpack.c.l.b16 %v1113
    %v1217 = vunpack.c.l.b16 %v1114
    %v1218 = vunpack.c.l.b16 %v1115
    %v1219 = vunpack.c.l.b16 %v1116
    %v1220 = vunpack.c.l.b16 %v1117
    %v1221 = vunpack.c.l.b16 %v1118
    %v1222 = vunpack.c.l.b16 %v1119
    %v1223 = vunpack.c.l.b16 %v1120
    %v1224 = vunpack.c.l.b16 %v1121
    %v1225 = vunpack.c.l.b16 %v1122
    %v1226 = vunpack.c.l.b16 %v1123
    %v1227 = vunpack.c.l.b16 %v1124
    %v1228 = vunpack.c.l.b16 %v1125
    %v1229 = vpack.c.b16 %v1182, %v1181
    %v1230 = vpack.c.b16 %v1184, %v1183
    %v1231 = vpack.c.b16 %v1186, %v1185
    %v1232 = vpack.c.b16 %v1188, %v1187
    %v1233 = vpack.c.b16 %v1190, %v1189
    %v1234 = vpack.c.b16 %v1192, %v1191
    %v1235 = vpack.c.b16 %v1194, %v1193
    %v1236 = vpack.c.b16 %v1196, %v1195
    %v1237 = vpack.c.b16 %v1198, %v1197
    %v1238 = vpack.c.b16 %v1200, %v1199
    %v1239 = vpack.c.b16 %v1202, %v1201
    %v1240 = vpack.c.b16 %v1204, %v1203
    %v1241 = vpack.c.b16 %v1206, %v1205
    %v1242 = vpack.c.b16 %v1208, %v1207
    %v1243 = vpack.c.b16 %v1210, %v1209
    %v1244 = vpack.c.b16 %v1212, %v1211
    %v1245 = vpack.c.b16 %v1214, %v1213
    %v1246 = vpack.c.b16 %v1216, %v1215
    %v1247 = vpack.c.b16 %v1218, %v1217
    %v1248 = vpack.c.b16 %v1220, %v1219
    %v1249 = vpack.c.b16 %v1222, %v1221
    %v1250 = vpack.c.b16 %v1224, %v1223
    %v1251 = vpack.c.b16 %v1226, %v1225
    %v1252 = vpack.c.b16 %v1228, %v1227
    %1277 = vmatprep.subr.bf16.mxu0 0
    %1278 = vmatpush1.bf16.msra.mxu0 %v1229
    %1279 = vmatprep.subr.bf16.mxu0 0
    %1280 = vmatpush1.bf16.msra.mxu0 %v1230
    %1281 = vmatprep.subr.bf16.mxu0 0
    %1282 = vmatpush1.bf16.msra.mxu0 %v1231
    %1283 = vmatprep.subr.bf16.mxu0 0
    %1284 = vmatpush1.bf16.msra.mxu0 %v1232
    %1285 = vmatprep.subr.bf16.mxu0 0
    %1286 = vmatpush1.bf16.msra.mxu0 %v1233
    %1287 = vmatprep.subr.bf16.mxu0 0
    %1288 = vmatpush1.bf16.msra.mxu0 %v1234
    %1289 = vmatprep.subr.bf16.mxu0 0
    %1290 = vmatpush1.bf16.msra.mxu0 %v1235
    %1291 = vmatprep.subr.bf16.mxu0 0
    %1292 = vmatpush1.bf16.msra.mxu0 %v1236
    %1293 = vmatprep.subr.bf16.mxu0 0
    %1294 = vmatpush1.bf16.msra.mxu0 %v1237
    %1295 = vmatprep.subr.bf16.mxu0 0
    %1296 = vmatpush1.bf16.msra.mxu0 %v1238
    %1297 = vmatprep.subr.bf16.mxu0 0
    %1298 = vmatpush1.bf16.msra.mxu0 %v1239
    %1299 = vmatprep.subr.bf16.mxu0 0
    %1300 = vmatpush1.bf16.msra.mxu0 %v1240
    %1301 = vmatprep.subr.bf16.mxu0 0
    %1302 = vmatpush1.bf16.msra.mxu0 %v1241
    %1303 = vmatprep.subr.bf16.mxu0 0
    %1304 = vmatpush1.bf16.msra.mxu0 %v1242
    %1305 = vmatprep.subr.bf16.mxu0 0
    %1306 = vmatpush1.bf16.msra.mxu0 %v1243
    %1307 = vmatprep.subr.bf16.mxu0 0
    %1308 = vmatpush1.bf16.msra.mxu0 %v1244
    %1309 = vmatprep.mubr.bf16.mxu0 %v1076
    %1310 = vmatmul.mubr.bf16.gmra.mrb[0].mxu0 %v1075
    %v1311 = vpop.f32.mrb[0].mxu0
    %v1312 = vadd.f32 %v1131, %v1311
    %v1313 = vpop.f32.mrb[0].mxu0
    %v1314 = vpop.f32.mrb[0].mxu0
    %v1315 = vadd.f32 %v1131, %v1314
    %v1316 = vpop.f32.mrb[0].mxu0
    %1317 = vdwg.mxu0
    %1318 = vmatprep.subr.bf16.mxu0 0
    %1319 = vmatpush1.bf16.msra.mxu0 %v1245
    %1320 = vmatprep.subr.bf16.mxu0 0
    %1321 = vmatpush1.bf16.msra.mxu0 %v1246
    %1322 = vmatprep.subr.bf16.mxu0 0
    %1323 = vmatpush1.bf16.msra.mxu0 %v1247
    %1324 = vmatprep.subr.bf16.mxu0 0
    %1325 = vmatpush1.bf16.msra.mxu0 %v1248
    %1326 = vmatprep.subr.bf16.mxu0 0
    %1327 = vmatpush1.bf16.msra.mxu0 %v1249
    %1328 = vmatprep.subr.bf16.mxu0 0
    %1329 = vmatpush1.bf16.msra.mxu0 %v1250
    %1330 = vmatprep.subr.bf16.mxu0 0
    %1331 = vmatpush1.bf16.msra.mxu0 %v1251
    %1332 = vmatprep.subr.bf16.mxu0 0
    %1333 = vmatpush1.bf16.msra.mxu0 %v1252
    %1334 = vmatprep.subr.bf16.mxu0 0
    %1335 = vmatpush1.bf16.msra.mxu0 0
    %1336 = vmatprep.subr.bf16.mxu0 0
    %1337 = vmatpush1.bf16.msra.mxu0 0
    %1338 = vmatprep.subr.bf16.mxu0 0
    %1339 = vmatpush1.bf16.msra.mxu0 0
    %1340 = vmatprep.subr.bf16.mxu0 0
    %1341 = vmatpush1.bf16.msra.mxu0 0
    %1342 = vmatprep.subr.bf16.mxu0 0
    %1343 = vmatpush1.bf16.msra.mxu0 0
    %1344 = vmatprep.subr.bf16.mxu0 0
    %1345 = vmatpush1.bf16.msra.mxu0 0
    %1346 = vmatprep.subr.bf16.mxu0 0
    %1347 = vmatpush1.bf16.msra.mxu0 0
    %1348 = vmatprep.subr.bf16.mxu0 0
    %1349 = vmatpush1.bf16.msra.mxu0 0
    %1350 = vmatprep.mubr.bf16.mxu0 0
    %1351 = vmatmul.mubr.bf16.gmra.mrb[0].mxu0 %v1077
    %v1352 = vpop.f32.mrb[0].mxu0
    %v1353 = vadd.f32 %v1312, %v1352
    %v1354 = vpop.f32.mrb[0].mxu0
    %v1355 = vpop.f32.mrb[0].mxu0
    %v1356 = vadd.f32 %v1315, %v1355
    %v1357 = vpop.f32.mrb[0].mxu0
    %1358 = vdwg.mxu0
    %v1359 = vtanh.pop %v1353
    %v1360 = vtanh.pop %v1356
    %1361 = vst [vmem:[%s7] sm:$0xff] %v1359
    %1362 = vst [vmem:[%s7 + $0x8] sm:$0xff] %v1360
    // Predicated region
    $region42: #{actor_forward.1} parent=1 // pred_check
      _
    $region43: #{actor_forward.1} parent=1 // pred_check_branch
      %1364 = sbr.rel (0) target = $region45
    $region44: #{actor_forward.1} parent=1 // pred_region
      _
    $region45: #{actor_forward.1} parent=1 // pred_fallthru
      _
    // Predicated region
    $region46: #{actor_forward.1} parent=1 // pred_check
      _
    $region47: #{actor_forward.1} parent=1 // pred_check_branch
      %1366 = sbr.rel (0) target = $region49
    $region48: #{actor_forward.1} parent=1 // pred_region
      _
    $region49: #{actor_forward.1} parent=1 // pred_fallthru
      _
    %1367 = vsyncpa [#allocation3], 1
    %1368 = vsyncpa [#allocation5], 1

</llo_original>
